<compile_context>
chip_gen: v5e
topology: v5e:2x2
jax: 0.10.0
libtpu: 0.0.40
codegen_flags: <defaults>
</compile_context>

<pallas_src>
import jax
import jax.numpy as jnp
from jax.experimental import pallas as pl
from jax.experimental.pallas import tpu as pltpu


def _round_up(x, m):
    return ((x + m - 1) // m) * m


# ----------------------------------------------------------------------------
# Kernel
# ----------------------------------------------------------------------------
def _fused_box_head_kernel(x_ref, w_ref, b_ref, out_ref):
    """One fused linear head on the MXU.

    x_ref:   [tm, C]      row tile of flattened box features (original dtype)
    w_ref:   [C, F_pad]   fused (cls | bbox) weight, bf16, resident
    b_ref:   [1, F_pad]   fused bias, f32, resident
    out_ref: [tm, F_pad]  output tile (original dtype)
    """
    # Cast to the MXU compute dtype in-kernel (VPU work, hidden under DMA/MXU)
    # instead of paying a separate HBM read+write pass in the wrapper.
    x_c = x_ref[...].astype(w_ref.dtype)
    acc = jnp.dot(x_c, w_ref[...], preferred_element_type=jnp.float32)
    out_ref[...] = (acc + b_ref[...]).astype(out_ref.dtype)


# ----------------------------------------------------------------------------
# One-time parameter preparation (model setup time, not per forward call)
# ----------------------------------------------------------------------------
def prepare_cascade_box_predictor_params(cls_w, cls_b, bbox_w, bbox_b,
                                         compute_dtype=jnp.bfloat16,
                                         lane_pad=128):
    """Fuse + transpose + pad + cast the two heads' parameters.

    Args:
      cls_w:  [K, C]   (PyTorch nn.Linear layout)
      cls_b:  [K]
      bbox_w: [4K, C]
      bbox_b: [4K]
    Returns:
      (w_fused [C, F_pad] compute_dtype, b_fused [1, F_pad] f32, K, 4K)
    """
    k = cls_w.shape[0]
    k4 = bbox_w.shape[0]
    f = k + k4
    f_pad = _round_up(f, lane_pad)

    w_fused = jnp.concatenate([cls_w.T, bbox_w.T], axis=1)          # [C, F]
    b_fused = jnp.concatenate([cls_b, bbox_b], axis=0)              # [F]
    if f_pad != f:
        w_fused = jnp.pad(w_fused, ((0, 0), (0, f_pad - f)))
        b_fused = jnp.pad(b_fused, ((0, f_pad - f),))
    w_fused = w_fused.astype(compute_dtype)
    b_fused = b_fused.reshape(1, f_pad).astype(jnp.float32)
    return w_fused, b_fused, k, k4


# ----------------------------------------------------------------------------
# Wrapper
# ----------------------------------------------------------------------------
def _vmem_cap_bytes():
    """Hardware-derived VMEM cap (keeps the same code portable to v7x)."""
    try:
        return int(0.75 * pltpu.get_tpu_info().vmem_capacity_bytes)
    except Exception:
        return 48 * 1024 * 1024  # conservative: fits v7x's 64 MiB physical VMEM


def _pick_tm(n_pad, tm_max):
    """Row tile: 16-aligned (bf16 sublane packing), <= n_pad, and chosen so
    the grid has >= 2 steps when there is enough work (v7x dual-TC)."""
    if n_pad <= 16:
        return n_pad                                   # tiny: single tile
    return min(tm_max, _round_up((n_pad + 1) // 2, 16))


def cascade_box_predictor(x, w_fused, b_fused, k, k4, tm_max=512):
    """JAX wrapper mirroring CascadeBoxPredictor.forward.

    Args:
      x:       box features, any shape [N, ...] (flattened to [N, C])
      w_fused: [C, F_pad]  fused transposed weight from prepare_* (bf16)
      b_fused: [1, F_pad]  fused f32 bias from prepare_*
      k, k4:   num_classes, num_classes * 4
    Returns:
      (scores [N, K], bbox_deltas [N, 4K]) in x.dtype
    """
    if x.ndim > 2:
        x = x.reshape(x.shape[0], -1)            # == torch.flatten(x, start_dim=1)
    n, c = x.shape
    out_dtype = x.dtype
    f_pad = w_fused.shape[1]

    if n == 0:                                   # zero ROIs: real cascade case
        return (jnp.zeros((0, k), out_dtype), jnp.zeros((0, k4), out_dtype))

    # Pad rows to a sublane multiple only when ragged (common ROI counts are
    # already multiples of 8, so x is normally passed through untouched).
    n_pad = _round_up(n, 8)
    if n_pad != n:
        x = jnp.pad(x, ((0, n_pad - n), (0, 0)))

    tm_max = _round_up(max(int(tm_max), 16), 16)
    tm = _pick_tm(n_pad, tm_max)

    x_item = jnp.dtype(x.dtype).itemsize
    w_item = jnp.dtype(w_fused.dtype).itemsize
    o_item = jnp.dtype(out_dtype).itemsize

    vmem_cap = _vmem_cap_bytes()

    def vmem_need(t):
        return (2 * t * c * x_item            # double-buffered x tiles (orig dtype)
                + c * f_pad * w_item          # resident fused weight (1 buffer)
                + f_pad * 4                   # resident bias
                + 2 * t * f_pad * o_item      # double-buffered out tiles
                + (2 << 20))                  # Mosaic scratch headroom

    while tm > 16 and vmem_need(tm) > vmem_cap:
        tm = max(16, _round_up(tm // 2, 16))

    grid = (pl.cdiv(n_pad, tm),)              # ragged last tile -> masked stores
    vmem_limit = int(min(vmem_cap, max(2 * vmem_need(tm), 32 * 1024 * 1024)))

    cost = pl.CostEstimate(
        flops=2 * n_pad * c * f_pad,
        transcendentals=0,
        bytes_accessed=(n_pad * c * x_item
                        + c * f_pad * w_item
                        + f_pad * 4
                        + n_pad * f_pad * o_item),
    )

    def build_call(resident_kwargs):
        in_specs = [
            pl.BlockSpec((tm, c), lambda i: (i, 0)),                    # x: pipelined
            pl.BlockSpec((c, f_pad), lambda i: (0, 0), **resident_kwargs),  # weight
            pl.BlockSpec((1, f_pad), lambda i: (0, 0), **resident_kwargs),  # bias
        ]
        return pl.pallas_call(
            _fused_box_head_kernel,
            out_shape=jax.ShapeDtypeStruct((n_pad, f_pad), out_dtype),
            grid=grid,
            in_specs=in_specs,
            out_specs=pl.BlockSpec((tm, f_pad), lambda i: (i, 0)),
            compiler_params=pltpu.CompilerParams(
                dimension_semantics=("parallel",),
                vmem_limit_bytes=vmem_limit,
            ),
            cost_estimate=cost,
        )

    try:
        # Constant index_map -> second pipeline buffer for weight/bias is dead
        # VMEM; single-buffer them (buys x/out-tile headroom on v7x's 64 MiB).
        out = build_call({"pipeline_mode": pl.Buffered(1)})(x, w_fused, b_fused)
    except Exception:
        # Fallback for JAX versions without BlockSpec.pipeline_mode support.
        out = build_call({})(x, w_fused, b_fused)

    trimmed = out[:n, :k + k4]                 # one trim, then a cheap split
    return trimmed[:, :k], trimmed[:, k:]


# ----------------------------------------------------------------------------
# Demo / self-test
# ----------------------------------------------------------------------------
if __name__ == "__main__":
    # Small, module-consistent shapes:
    #   box features: [N=8, C=2, H=4, W=4]  -> in_channels = 2*4*4 = 32
    #   num_classes (incl. background) = 5
    N, C, H, W = 8, 2, 4, 4
    in_channels = C * H * W
    num_classes = 5

    key = jax.random.PRNGKey(0)
    kx, kc, kb = jax.random.split(key, 3)

    x = jax.random.normal(kx, (N, C, H, W), dtype=jnp.float32)

    # Deterministic init matching the module: normal(std=0.01 / 0.001), zero bias.
    cls_w = 0.01 * jax.random.normal(kc, (num_classes, in_channels), dtype=jnp.float32)
    cls_b = jnp.zeros((num_classes,), dtype=jnp.float32)
    bbox_w = 0.001 * jax.random.normal(kb, (num_classes * 4, in_channels), dtype=jnp.float32)
    bbox_b = jnp.zeros((num_classes * 4,), dtype=jnp.float32)

    # One-time weight prep (model setup time).
    w_fused, b_fused, k, k4 = prepare_cascade_box_predictor_params(
        cls_w, cls_b, bbox_w, bbox_b)

    scores, bbox_deltas = cascade_box_predictor(x, w_fused, b_fused, k, k4)
    jax.block_until_ready((scores, bbox_deltas))

    # References in plain JAX.
    xf = x.reshape(N, -1)

    # (a) bf16-consistent reference (same rounding as the kernel, f32 accumulation).
    xf_bf = xf.astype(jnp.bfloat16).astype(jnp.float32)
    cw_bf = cls_w.astype(jnp.bfloat16).astype(jnp.float32)
    bw_bf = bbox_w.astype(jnp.bfloat16).astype(jnp.float32)
    ref_scores_bf = xf_bf @ cw_bf.T + cls_b
    ref_bbox_bf = xf_bf @ bw_bf.T + bbox_b

    # (b) full-f32 reference (loose check, bounds bf16 rounding error).
    ref_scores = xf @ cls_w.T + cls_b
    ref_bbox = xf @ bbox_w.T + bbox_b

    assert scores.shape == (N, num_classes)
    assert bbox_deltas.shape == (N, num_classes * 4)
    assert jnp.allclose(scores, ref_scores_bf, atol=1e-4, rtol=1e-3)
    assert jnp.allclose(bbox_deltas, ref_bbox_bf, atol=1e-4, rtol=1e-3)
    assert jnp.allclose(scores, ref_scores, atol=5e-3, rtol=5e-2)
    assert jnp.allclose(bbox_deltas, ref_bbox, atol=5e-3, rtol=5e-2)

    # Zero-ROI guard (cascade R-CNN can produce empty proposals).
    s0, b0 = cascade_box_predictor(jnp.zeros((0, in_channels), jnp.float32),
                                   w_fused, b_fused, k, k4)
    assert s0.shape == (0, num_classes) and b0.shape == (0, num_classes * 4)

    print("KERNEL_OK")
</pallas_src>

<mosaic_0001>
module attributes {stable_mosaic.version = 11 : i64} {
  func.func @_fused_box_head_kernel(%arg0: i32, %arg1: memref<8x32xf32, #tpu.memory_space<vmem>>, %arg2: memref<32x128xbf16, #tpu.memory_space<vmem>>, %arg3: memref<1x128xf32, #tpu.memory_space<vmem>>, %arg4: memref<8x128xf32, #tpu.memory_space<vmem>>) attributes {dimension_semantics = [#tpu.dimension_semantics<parallel>], iteration_bounds = array<i64: 1>, scalar_prefetch = 0 : i64, scratch_operands = 0 : i64, tpu.core_type = #tpu.core_type<tc>, window_params = [{transform_indices = @transform_0, window_bounds = array<i64: 8, 32>}, {pipeline_mode = #tpu.pipeline_mode<synchronous>, transform_indices = @transform_1, window_bounds = array<i64: 32, 128>}, {pipeline_mode = #tpu.pipeline_mode<synchronous>, transform_indices = @transform_2, window_bounds = array<i64: 1, 128>}, {transform_indices = @transform_3, window_bounds = array<i64: 8, 128>}]} {
    %c0 = arith.constant 0 : index
    %c0_0 = arith.constant 0 : index
    %0 = vector.load %arg1[%c0, %c0_0] : memref<8x32xf32, #tpu.memory_space<vmem>>, vector<8x32xf32>
    %1 = arith.truncf %0 : vector<8x32xf32> to vector<8x32xbf16>
    %c0_1 = arith.constant 0 : index
    %c0_2 = arith.constant 0 : index
    %2 = vector.load %arg2[%c0_1, %c0_2] : memref<32x128xbf16, #tpu.memory_space<vmem>>, vector<32x128xbf16>
    %cst = arith.constant dense<0.000000e+00> : vector<8x128xf32>
    %3 = tpu.matmul %1, %2, %cst {dimension_numbers = #tpu.dot_dimension_numbers<[1], [0], [0], [1], [0, 0, 1, 1], [], []>} : vector<8x32xbf16>, vector<32x128xbf16>, vector<8x128xf32> -> vector<8x128xf32>
    %c0_3 = arith.constant 0 : index
    %c0_4 = arith.constant 0 : index
    %4 = vector.load %arg3[%c0_3, %c0_4] : memref<1x128xf32, #tpu.memory_space<vmem>>, vector<1x128xf32>
    %5 = vector.broadcast %4 : vector<1x128xf32> to vector<8x128xf32>
    %6 = arith.addf %3, %5 : vector<8x128xf32>
    %c0_5 = arith.constant 0 : index
    %c0_6 = arith.constant 0 : index
    %7 = vector.load %arg4[%c0_5, %c0_6] : memref<8x128xf32, #tpu.memory_space<vmem>>, vector<8x128xf32>
    tpu.vector_store %arg4[%c0_5, %c0_6], %6 {strides = array<i32>} : memref<8x128xf32, #tpu.memory_space<vmem>>, vector<8x128xf32>,
    return
  }
  func.func @transform_0(%arg0: i32) -> (i32, i32) {
    %c0_i32 = arith.constant 0 : i32
    %c0_i32_0 = arith.constant 0 : i32
    return %arg0, %c0_i32 : i32, i32
  }
  func.func @transform_1(%arg0: i32) -> (i32, i32) {
    %c0_i32 = arith.constant 0 : i32
    %c0_i32_0 = arith.constant 0 : i32
    %c0_i32_1 = arith.constant 0 : i32
    return %c0_i32, %c0_i32_0 : i32, i32
  }
  func.func @transform_2(%arg0: i32) -> (i32, i32) {
    %c0_i32 = arith.constant 0 : i32
    %c0_i32_0 = arith.constant 0 : i32
    %c0_i32_1 = arith.constant 0 : i32
    return %c0_i32, %c0_i32_0 : i32, i32
  }
  func.func @transform_3(%arg0: i32) -> (i32, i32) {
    %c0_i32 = arith.constant 0 : i32
    %c0_i32_0 = arith.constant 0 : i32
    return %arg0, %c0_i32 : i32, i32
  }
}

module attributes {stable_mosaic.version = 11 : i64} {
  func.func @_fused_box_head_kernel(%arg0: i32, %arg1: memref<8x32xf32, #tpu.memory_space<vmem>>, %arg2: memref<32x128xbf16, #tpu.memory_space<vmem>>, %arg3: memref<1x128xf32, #tpu.memory_space<vmem>>, %arg4: memref<8x128xf32, #tpu.memory_space<vmem>>) attributes {dimension_semantics = [#tpu.dimension_semantics<parallel>], iteration_bounds = array<i64: 1>, scalar_prefetch = 0 : i64, scratch_operands = 0 : i64, tpu.core_type = #tpu.core_type<tc>, window_params = [{transform_indices = @transform_0, window_bounds = array<i64: 8, 32>}, {pipeline_mode = #tpu.pipeline_mode<synchronous>, transform_indices = @transform_1, window_bounds = array<i64: 32, 128>}, {pipeline_mode = #tpu.pipeline_mode<synchronous>, transform_indices = @transform_2, window_bounds = array<i64: 1, 128>}, {transform_indices = @transform_3, window_bounds = array<i64: 8, 128>}]} {
    %c0 = arith.constant 0 : index
    %c0_0 = arith.constant 0 : index
    %0 = vector.load %arg1[%c0, %c0_0] : memref<8x32xf32, #tpu.memory_space<vmem>>, vector<8x32xf32>
    %1 = arith.truncf %0 : vector<8x32xf32> to vector<8x32xbf16>
    %c0_1 = arith.constant 0 : index
    %c0_2 = arith.constant 0 : index
    %2 = vector.load %arg2[%c0_1, %c0_2] : memref<32x128xbf16, #tpu.memory_space<vmem>>, vector<32x128xbf16>
    %cst = arith.constant dense<0.000000e+00> : vector<8x128xf32>
    %3 = tpu.matmul %1, %2, %cst {dimension_numbers = #tpu.dot_dimension_numbers<[1], [0], [0], [1], [0, 0, 1, 1], [], []>} : vector<8x32xbf16>, vector<32x128xbf16>, vector<8x128xf32> -> vector<8x128xf32>
    %c0_3 = arith.constant 0 : index
    %c0_4 = arith.constant 0 : index
    %4 = vector.load %arg3[%c0_3, %c0_4] : memref<1x128xf32, #tpu.memory_space<vmem>>, vector<1x128xf32>
    %5 = vector.broadcast %4 : vector<1x128xf32> to vector<8x128xf32>
    %6 = arith.addf %3, %5 : vector<8x128xf32>
    %c0_5 = arith.constant 0 : index
    %c0_6 = arith.constant 0 : index
    %7 = vector.load %arg4[%c0_5, %c0_6] : memref<8x128xf32, #tpu.memory_space<vmem>>, vector<8x128xf32>
    tpu.vector_store %arg4[%c0_5, %c0_6], %6 {strides = array<i32>} : memref<8x128xf32, #tpu.memory_space<vmem>>, vector<8x128xf32>,
    return
  }
  func.func @transform_0(%arg0: i32) -> (i32, i32) {
    %c0_i32 = arith.constant 0 : i32
    %c0_i32_0 = arith.constant 0 : i32
    return %arg0, %c0_i32 : i32, i32
  }
  func.func @transform_1(%arg0: i32) -> (i32, i32) {
    %c0_i32 = arith.constant 0 : i32
    %c0_i32_0 = arith.constant 0 : i32
    %c0_i32_1 = arith.constant 0 : i32
    return %c0_i32, %c0_i32_0 : i32, i32
  }
  func.func @transform_2(%arg0: i32) -> (i32, i32) {
    %c0_i32 = arith.constant 0 : i32
    %c0_i32_0 = arith.constant 0 : i32
    %c0_i32_1 = arith.constant 0 : i32
    return %c0_i32, %c0_i32_0 : i32, i32
  }
  func.func @transform_3(%arg0: i32) -> (i32, i32) {
    %c0_i32 = arith.constant 0 : i32
    %c0_i32_0 = arith.constant 0 : i32
    return %arg0, %c0_i32 : i32, i32
  }
}

</mosaic_0001>

<llo_original>
// kernel: tpu_custom_call.1
$region0: #{tpu_custom_call.1}
  #allocation0 [shape = 'u32[]', space=smem, size = 0x4, offset = 0x4, fixed_abs, tag = 'smem constant byte address 0x4 - core index']
  #allocation1 [shape = 'u32[72,128]{1,0:T(1,128)}', space=vmem, size = 0x9000, scoped, tag = 'internal scratch']
  %s0 = inlined_call_operand.hbm [shape: f32[8,32], index: 0, kind: input, shape index: {}]
  %s1 = inlined_call_operand.hbm [shape: bf16[32,128], index: 1, kind: input, shape index: {}]
  %s2 = inlined_call_operand.vmem [shape: f32[1,128], index: 2, kind: input, shape index: {}]
  %s3 = inlined_call_operand.hbm [shape: f32[8,128], index: 3, kind: output, shape index: {}]
  %s4 = sld [smem:[#allocation0]]
  $region30: #{tpu_custom_call.1} parent=0
    _
  %s6 = ssub.s32 1, %s4
  %s7 = scalar_select 0, %s6, %s4
  $region1: #{tpu_custom_call.1} parent=0
    #allocation2 [shape = 'u8[4096]{0}', space=vmem, size = 0x1000, scoped, tag = 'input window, operand 0, single buffered']
    #allocation3 [shape = 's32[1]{0}', space=sflag, size = 0x4, scoped, tag = 'scoped memory for tpu_custom_call.1']
    #allocation4 [shape = 's32[1]{0}', space=sflag, size = 0x4, scoped, tag = 'scoped memory for tpu_custom_call.1']
    #allocation5 [shape = 'u8[8192]{0}', space=vmem, size = 0x2000, scoped, tag = 'input window, operand 1, single buffered']
    #allocation6 [shape = 's32[1]{0}', space=sflag, size = 0x4, scoped, tag = 'scoped memory for tpu_custom_call.1']
    #allocation7 [shape = 'u8[4096]{0}', space=vmem, size = 0x1000, scoped, tag = 'output window, operand 0, single buffered']
    %8 = vsyncpa [#allocation3], 0
    %9 = vsyncpa [#allocation6], 0
    %10 = vsyncpa [#allocation4], 0
    // Predicated region
    $region2: #{tpu_custom_call.1} parent=1 // pred_check
      _
    $region3: #{tpu_custom_call.1} parent=1 // pred_check_branch
      %12 = sbr.rel (0) target = $region5
    $region4: #{tpu_custom_call.1} parent=1 // pred_region
      %14 = vsyncadd [#allocation3], 0
      %s16 = sshll.u32 %s0, 4
      %s17 = int_to_ptr.hbm [resolvable:$true] %s16
      %s18 = sshll.u32 [#allocation2], 4
      %s19 = int_to_ptr.vmem [resolvable:$true] %s18
      %21 = dma.hbm_to_vmem [thread:$0]  %s17, 128, %s19, [#allocation3]
    $region5: #{tpu_custom_call.1} parent=1 // pred_fallthru
      _
    // Predicated region
    $region6: #{tpu_custom_call.1} parent=1 // pred_check
      _
    $region7: #{tpu_custom_call.1} parent=1 // pred_check_branch
      %23 = sbr.rel (0) target = $region9
    $region8: #{tpu_custom_call.1} parent=1 // pred_region
      %25 = vsyncadd [#allocation6], 0
      %s26 = sshll.u32 %s1, 4
      %s27 = int_to_ptr.hbm [resolvable:$true] %s26
      %s28 = sshll.u32 [#allocation5], 4
      %s29 = int_to_ptr.vmem [resolvable:$true] %s28
      %34 = dma.hbm_to_vmem [thread:$0]  %s27, 256, %s29, [#allocation6], 64, 64, 4
    $region9: #{tpu_custom_call.1} parent=1 // pred_fallthru
      _
    // Predicated region
    $region10: #{tpu_custom_call.1} parent=1 // pred_check
      _
    $region11: #{tpu_custom_call.1} parent=1 // pred_check_branch
      %36 = sbr.rel (0) target = $region13
    $region12: #{tpu_custom_call.1} parent=1 // pred_region
      _
    $region13: #{tpu_custom_call.1} parent=1 // pred_fallthru
      _
    // Predicated region
    $region14: #{tpu_custom_call.1} parent=1 // pred_check
      _
    $region15: #{tpu_custom_call.1} parent=1 // pred_check_branch
      %38 = sbr.rel (0) target = $region17
    $region16: #{tpu_custom_call.1} parent=1 // pred_region
      %40 = dma.done [#allocation3], 128
    $region17: #{tpu_custom_call.1} parent=1 // pred_fallthru
      _
    // Predicated region
    $region18: #{tpu_custom_call.1} parent=1 // pred_check
      _
    $region19: #{tpu_custom_call.1} parent=1 // pred_check_branch
      %42 = sbr.rel (0) target = $region21
    $region20: #{tpu_custom_call.1} parent=1 // pred_region
      %44 = dma.done [#allocation6], 256
    $region21: #{tpu_custom_call.1} parent=1 // pred_fallthru
      _
    %v46 = vld [vmem:[#allocation2] sm:$0xff]
    %v47 = vpack.c.bf16 %v46, %v46
    %v48 = vld [vmem:[#allocation5] sm:$0xf]
    %v49 = vld [vmem:[#allocation5 + $0x4] sm:$0xf]
    %v50 = vld [vmem:[#allocation5 + $0x8] sm:$0xf]
    %v51 = vld [vmem:[#allocation5 + $0xc] sm:$0xf]
    %v52 = vld [vmem:[%s2] sm:$0x1]
    %v54 = vperm.slane %v52, 0
    %v60 = vunpack.c.l.b16 %v48
    %v61 = vunpack.c.l.b16 %v49
    %v62 = vunpack.c.l.b16 %v50
    %v63 = vunpack.c.l.b16 %v51
    %v64 = vpack.c.b16 %v61, %v60
    %v65 = vpack.c.b16 %v63, %v62
    %vm68 = vcmask 261120
    %v70 = vsel %vm68, %v47, 0
    %72 = vmatpush.bf16.msra.mxu0 0
    %73 = vmatpush.bf16.msra.mxu0 0
    %74 = vmatpush.bf16.msra.mxu0 0
    %75 = vmatpush.bf16.msra.mxu0 0
    %76 = vmatpush.bf16.msra.mxu0 0
    %77 = vmatpush.bf16.msra.mxu0 0
    %78 = vmatpush.bf16.msra.mxu0 %v65
    %79 = vmatpush.bf16.msra.mxu0 %v64
    %80 = vmatmul.bf16.gmra.mxu0 %v70
    %v81 = vpop.f32.mrf.mxu0
    %v82 = vadd.f32 %v54, %v81
    %v83 = vpop.f32.mrf.mxu0
    %84 = vdwg.mxu0
    %85 = vst [vmem:[#allocation7] sm:$0xff] %v82
    // Predicated region
    $region22: #{tpu_custom_call.1} parent=1 // pred_check
      _
    $region23: #{tpu_custom_call.1} parent=1 // pred_check_branch
      %87 = sbr.rel (0) target = $region25
    $region24: #{tpu_custom_call.1} parent=1 // pred_region
      %89 = vsyncadd [#allocation4], 0
      %s91 = sshll.u32 [#allocation7], 4
      %s92 = int_to_ptr.vmem [resolvable:$true] %s91
      %s93 = sshll.u32 %s3, 4
      %s94 = int_to_ptr.hbm [resolvable:$true] %s93
      %96 = dma.vmem_to_hbm [thread:$0]  %s92, 128, %s94, [#allocation4]
    $region25: #{tpu_custom_call.1} parent=1 // pred_fallthru
      _
    // Predicated region
    $region26: #{tpu_custom_call.1} parent=1 // pred_check
      _
    $region27: #{tpu_custom_call.1} parent=1 // pred_check_branch
      %98 = sbr.rel (0) target = $region29
    $region28: #{tpu_custom_call.1} parent=1 // pred_region
      %100 = dma.done [#allocation4], 128
    $region29: #{tpu_custom_call.1} parent=1 // pred_fallthru
      _
    %101 = vsyncpa [#allocation3], 1
    %102 = vsyncpa [#allocation6], 1
    %103 = vsyncpa [#allocation4], 1

// kernel: tpu_custom_call.1
$region0: #{tpu_custom_call.1}
  #allocation0 [shape = 'u32[]', space=smem, size = 0x4, offset = 0x4, fixed_abs, tag = 'smem constant byte address 0x4 - core index']
  #allocation1 [shape = 'u32[72,128]{1,0:T(1,128)}', space=vmem, size = 0x9000, scoped, tag = 'internal scratch']
  %s0 = inlined_call_operand.hbm [shape: f32[8,32], index: 0, kind: input, shape index: {}]
  %s1 = inlined_call_operand.hbm [shape: bf16[32,128], index: 1, kind: input, shape index: {}]
  %s2 = inlined_call_operand.vmem [shape: f32[1,128], index: 2, kind: input, shape index: {}]
  %s3 = inlined_call_operand.hbm [shape: f32[8,128], index: 3, kind: output, shape index: {}]
  %s4 = sld [smem:[#allocation0]]
  $region30: #{tpu_custom_call.1} parent=0
    _
  %s6 = ssub.s32 1, %s4
  %s7 = scalar_select 0, %s6, %s4
  $region1: #{tpu_custom_call.1} parent=0
    #allocation2 [shape = 'u8[4096]{0}', space=vmem, size = 0x1000, scoped, tag = 'input window, operand 0, single buffered']
    #allocation3 [shape = 's32[1]{0}', space=sflag, size = 0x4, scoped, tag = 'scoped memory for tpu_custom_call.1']
    #allocation4 [shape = 's32[1]{0}', space=sflag, size = 0x4, scoped, tag = 'scoped memory for tpu_custom_call.1']
    #allocation5 [shape = 'u8[8192]{0}', space=vmem, size = 0x2000, scoped, tag = 'input window, operand 1, single buffered']
    #allocation6 [shape = 's32[1]{0}', space=sflag, size = 0x4, scoped, tag = 'scoped memory for tpu_custom_call.1']
    #allocation7 [shape = 'u8[4096]{0}', space=vmem, size = 0x1000, scoped, tag = 'output window, operand 0, single buffered']
    %8 = vsyncpa [#allocation3], 0
    %9 = vsyncpa [#allocation6], 0
    %10 = vsyncpa [#allocation4], 0
    // Predicated region
    $region2: #{tpu_custom_call.1} parent=1 // pred_check
      _
    $region3: #{tpu_custom_call.1} parent=1 // pred_check_branch
      %12 = sbr.rel (0) target = $region5
    $region4: #{tpu_custom_call.1} parent=1 // pred_region
      %14 = vsyncadd [#allocation3], 0
      %s16 = sshll.u32 %s0, 4
      %s17 = int_to_ptr.hbm [resolvable:$true] %s16
      %s18 = sshll.u32 [#allocation2], 4
      %s19 = int_to_ptr.vmem [resolvable:$true] %s18
      %21 = dma.hbm_to_vmem [thread:$0]  %s17, 128, %s19, [#allocation3]
    $region5: #{tpu_custom_call.1} parent=1 // pred_fallthru
      _
    // Predicated region
    $region6: #{tpu_custom_call.1} parent=1 // pred_check
      _
    $region7: #{tpu_custom_call.1} parent=1 // pred_check_branch
      %23 = sbr.rel (0) target = $region9
    $region8: #{tpu_custom_call.1} parent=1 // pred_region
      %25 = vsyncadd [#allocation6], 0
      %s26 = sshll.u32 %s1, 4
      %s27 = int_to_ptr.hbm [resolvable:$true] %s26
      %s28 = sshll.u32 [#allocation5], 4
      %s29 = int_to_ptr.vmem [resolvable:$true] %s28
      %34 = dma.hbm_to_vmem [thread:$0]  %s27, 256, %s29, [#allocation6], 64, 64, 4
    $region9: #{tpu_custom_call.1} parent=1 // pred_fallthru
      _
    // Predicated region
    $region10: #{tpu_custom_call.1} parent=1 // pred_check
      _
    $region11: #{tpu_custom_call.1} parent=1 // pred_check_branch
      %36 = sbr.rel (0) target = $region13
    $region12: #{tpu_custom_call.1} parent=1 // pred_region
      _
    $region13: #{tpu_custom_call.1} parent=1 // pred_fallthru
      _
    // Predicated region
    $region14: #{tpu_custom_call.1} parent=1 // pred_check
      _
    $region15: #{tpu_custom_call.1} parent=1 // pred_check_branch
      %38 = sbr.rel (0) target = $region17
    $region16: #{tpu_custom_call.1} parent=1 // pred_region
      %40 = dma.done [#allocation3], 128
    $region17: #{tpu_custom_call.1} parent=1 // pred_fallthru
      _
    // Predicated region
    $region18: #{tpu_custom_call.1} parent=1 // pred_check
      _
    $region19: #{tpu_custom_call.1} parent=1 // pred_check_branch
      %42 = sbr.rel (0) target = $region21
    $region20: #{tpu_custom_call.1} parent=1 // pred_region
      %44 = dma.done [#allocation6], 256
    $region21: #{tpu_custom_call.1} parent=1 // pred_fallthru
      _
    %v46 = vld [vmem:[#allocation2] sm:$0xff]
    %v47 = vpack.c.bf16 %v46, %v46
    %v48 = vld [vmem:[#allocation5] sm:$0xf]
    %v49 = vld [vmem:[#allocation5 + $0x4] sm:$0xf]
    %v50 = vld [vmem:[#allocation5 + $0x8] sm:$0xf]
    %v51 = vld [vmem:[#allocation5 + $0xc] sm:$0xf]
    %v52 = vld [vmem:[%s2] sm:$0x1]
    %v54 = vperm.slane %v52, 0
    %v60 = vunpack.c.l.b16 %v48
    %v61 = vunpack.c.l.b16 %v49
    %v62 = vunpack.c.l.b16 %v50
    %v63 = vunpack.c.l.b16 %v51
    %v64 = vpack.c.b16 %v61, %v60
    %v65 = vpack.c.b16 %v63, %v62
    %vm68 = vcmask 261120
    %v70 = vsel %vm68, %v47, 0
    %72 = vmatpush.bf16.msra.mxu0 0
    %73 = vmatpush.bf16.msra.mxu0 0
    %74 = vmatpush.bf16.msra.mxu0 0
    %75 = vmatpush.bf16.msra.mxu0 0
    %76 = vmatpush.bf16.msra.mxu0 0
    %77 = vmatpush.bf16.msra.mxu0 0
    %78 = vmatpush.bf16.msra.mxu0 %v65
    %79 = vmatpush.bf16.msra.mxu0 %v64
    %80 = vmatmul.bf16.gmra.mxu0 %v70
    %v81 = vpop.f32.mrf.mxu0
    %v82 = vadd.f32 %v54, %v81
    %v83 = vpop.f32.mrf.mxu0
    %84 = vdwg.mxu0
    %85 = vst [vmem:[#allocation7] sm:$0xff] %v82
    // Predicated region
    $region22: #{tpu_custom_call.1} parent=1 // pred_check
      _
    $region23: #{tpu_custom_call.1} parent=1 // pred_check_branch
      %87 = sbr.rel (0) target = $region25
    $region24: #{tpu_custom_call.1} parent=1 // pred_region
      %89 = vsyncadd [#allocation4], 0
      %s91 = sshll.u32 [#allocation7], 4
      %s92 = int_to_ptr.vmem [resolvable:$true] %s91
      %s93 = sshll.u32 %s3, 4
      %s94 = int_to_ptr.hbm [resolvable:$true] %s93
      %96 = dma.vmem_to_hbm [thread:$0]  %s92, 128, %s94, [#allocation4]
    $region25: #{tpu_custom_call.1} parent=1 // pred_fallthru
      _
    // Predicated region
    $region26: #{tpu_custom_call.1} parent=1 // pred_check
      _
    $region27: #{tpu_custom_call.1} parent=1 // pred_check_branch
      %98 = sbr.rel (0) target = $region29
    $region28: #{tpu_custom_call.1} parent=1 // pred_region
      %100 = dma.done [#allocation4], 128
    $region29: #{tpu_custom_call.1} parent=1 // pred_fallthru
      _
    %101 = vsyncpa [#allocation3], 1
    %102 = vsyncpa [#allocation6], 1
    %103 = vsyncpa [#allocation4], 1

</llo_original>
